<compile_context>
chip_gen: v6e
topology: v6e:2x2x1
jax: 0.10.0
libtpu: 0.0.40
codegen_flags: <defaults>
</compile_context>

<pallas_src>
import functools
import math

import jax
import jax.numpy as jnp
from jax.experimental import pallas as pl
from jax.experimental.pallas import tpu as pltpu


def _sisdr_kernel(x_ref, t_ref, loss_ref, acc_ref, *, eps, time_len, t_blk,
                  zero_mean):
    # x_ref / t_ref: (TR, t_blk) tiles; loss_ref: (1, 1, TR); acc_ref: (5, TR, 1)
    ti = pl.program_id(1)

    @pl.when(ti == 0)
    def _():
        acc_ref[...] = jnp.zeros_like(acc_ref)

    x = x_ref[...].astype(jnp.float32)
    t = t_ref[...].astype(jnp.float32)

    if time_len % t_blk != 0:
        # Zero the out-of-range tail columns of the last time block so the
        # moment sums only see valid samples.
        col = jax.lax.broadcasted_iota(jnp.int32, x.shape, 1) + ti * t_blk
        valid = col < time_len
        x = jnp.where(valid, x, 0.0)
        t = jnp.where(valid, t, 0.0)

    if zero_mean:
        acc_ref[0] += jnp.sum(x, axis=-1, keepdims=True)
        acc_ref[1] += jnp.sum(t, axis=-1, keepdims=True)
    acc_ref[2] += jnp.sum(x * t, axis=-1, keepdims=True)
    acc_ref[3] += jnp.sum(x * x, axis=-1, keepdims=True)
    acc_ref[4] += jnp.sum(t * t, axis=-1, keepdims=True)

    @pl.when(ti == pl.num_programs(1) - 1)
    def _():
        sxt = acc_ref[2]
        sxx = acc_ref[3]
        stt = acc_ref[4]
        if zero_mean:
            inv_n = jnp.float32(1.0 / time_len)
            sx = acc_ref[0]
            st = acc_ref[1]
            xt = sxt - sx * st * inv_n          # Σ(x-x̄)(t-t̄)
            xx = sxx - sx * sx * inv_n          # Σ(x-x̄)²
            tt = stt - st * st * inv_n          # Σ(t-t̄)²
        else:
            xt, xx, tt = sxt, sxx, stt
        num = xt * xt / tt                       # ||alpha·t||² (alpha = xt/tt)
        den = jnp.maximum(xx - num, 0.0) + eps   # ||x - alpha·t||² + eps
        ratio = num / den + eps
        losses = (10.0 / math.log(10.0)) * jnp.log(ratio)      # (TR, 1)
        loss_ref[...] = losses.reshape(loss_ref.shape).astype(loss_ref.dtype)


def _round_up(x, m):
    return (x + m - 1) // m * m


def _select_tiles(rows, T, itemsize):
    # Per-input, per-buffer tile budget: 6 MiB.  With 2 inputs x double
    # buffering the input VMEM footprint is ~24 MiB, comfortably inside the
    # 48 MiB scoped limit we set (safe on v7x's 64 MiB physical VMEM).
    tile_budget_bytes = 6 * 1024 * 1024
    sub = max(8, 32 // itemsize)                 # 8 for f32, 16 for bf16
    max_elems = max(tile_budget_bytes // itemsize, sub * 128)
    rows_s = _round_up(rows, sub)

    if sub * T <= max_elems:
        # Full time axis resident; spend the rest of the budget on rows.
        t_blk = T
        tr = (max_elems // T) // sub * sub
        tr = max(sub, min(tr, 1024, rows_s))
        # Keep >= 2 row tiles when there is enough work (v7x megacore sharding).
        if rows_s >= 2 * sub and pl.cdiv(rows, tr) < 2:
            tr = max(sub, _round_up(pl.cdiv(rows, 2), sub))
    else:
        # Long audio: tile the time axis and accumulate moments across blocks.
        tr = sub
        t_blk = (max_elems // tr) // 128 * 128
        t_blk = max(128, min(t_blk, _round_up(T, 128)))
    return tr, t_blk


def sisdr_loss(input, target, *, zero_mean=True, eps=1e-8, reduction="mean"):
    """Negative SI-SDR loss. input/target: (batch, nchs, ..., T)."""
    assert input.shape == target.shape
    *lead, T = input.shape
    rows = 1
    for d in lead:
        rows *= d

    x = input.reshape(rows, T)
    t = target.reshape(rows, T)

    itemsize = jnp.dtype(input.dtype).itemsize
    tr, t_blk = _select_tiles(rows, T, itemsize)
    n_row_tiles = pl.cdiv(rows, tr)
    n_t_tiles = pl.cdiv(T, t_blk)

    kernel = functools.partial(
        _sisdr_kernel, eps=float(eps), time_len=T, t_blk=t_blk,
        zero_mean=bool(zero_mean))

    losses = pl.pallas_call(
        kernel,
        out_shape=jax.ShapeDtypeStruct((n_row_tiles, 1, tr), jnp.float32),
        grid_spec=pltpu.PrefetchScalarGridSpec(
            num_scalar_prefetch=0,
            grid=(n_row_tiles, n_t_tiles),
            in_specs=[
                pl.BlockSpec((tr, t_blk), lambda i, j: (i, j)),
                pl.BlockSpec((tr, t_blk), lambda i, j: (i, j)),
            ],
            out_specs=pl.BlockSpec((1, 1, tr), lambda i, j: (i, 0, 0)),
            scratch_shapes=[pltpu.VMEM((5, tr, 1), jnp.float32)],
        ),
        compiler_params=pltpu.CompilerParams(
            dimension_semantics=("parallel", "arbitrary"),
            vmem_limit_bytes=48 * 1024 * 1024,
        ),
    )(x, t)

    # Tail rows of the last row tile are garbage (never read by valid rows);
    # slice them off before the reduction.
    losses = losses.reshape(-1)[:rows].reshape(tuple(lead))

    if reduction == "mean":
        losses = jnp.mean(losses)
    elif reduction == "sum":
        losses = jnp.sum(losses)
    elif reduction != "none":
        raise ValueError(reduction)
    return -losses


def _ref_sisdr(x, t, eps=1e-8, reduction="mean"):
    x = x - jnp.mean(x, axis=-1, keepdims=True)
    t = t - jnp.mean(t, axis=-1, keepdims=True)
    alpha = (x * t).sum(-1) / (t ** 2).sum(-1)
    t = t * alpha[..., None]
    res = x - t
    l = 10 * jnp.log10((t ** 2).sum(-1) / ((res ** 2).sum(-1) + eps) + eps)
    if reduction == "mean":
        l = jnp.mean(l)
    elif reduction == "sum":
        l = jnp.sum(l)
    return -l


if __name__ == "__main__":
    key = jax.random.PRNGKey(0)
    k1, k2, k3, k4 = jax.random.split(key, 4)

    # Main check: (batch=2, nchs=4, T=256), mean reduction.
    batch, nchs, T = 2, 4, 256
    inp = jax.random.normal(k1, (batch, nchs, T), dtype=jnp.float32)
    tgt = jax.random.normal(k2, (batch, nchs, T), dtype=jnp.float32)
    out = sisdr_loss(inp, tgt, zero_mean=True, eps=1e-8, reduction="mean")
    jax.block_until_ready(out)
    r = _ref_sisdr(inp, tgt)
    assert jnp.allclose(out, r, rtol=1e-4, atol=1e-4), (out, r)

    # Secondary check: rows not a multiple of the row tile, no reduction.
    inp2 = jax.random.normal(k3, (3, 1, 200), dtype=jnp.float32)
    tgt2 = jax.random.normal(k4, (3, 1, 200), dtype=jnp.float32)
    out2 = sisdr_loss(inp2, tgt2, reduction="none")
    jax.block_until_ready(out2)
    r2 = _ref_sisdr(inp2, tgt2, reduction="none")
    assert out2.shape == r2.shape
    assert jnp.allclose(out2, r2, rtol=1e-4, atol=1e-4), (out2, r2)

    print("KERNEL_OK")
</pallas_src>

<mosaic_0001>
module attributes {stable_mosaic.version = 11 : i64} {
  func.func @_sisdr_kernel(%arg0: i32, %arg1: i32, %arg2: memref<8x256xf32, #tpu.memory_space<vmem>>, %arg3: memref<8x256xf32, #tpu.memory_space<vmem>>, %arg4: memref<1x1x8xf32, #tpu.memory_space<vmem>>, %arg5: memref<5x8x1xf32, #tpu.memory_space<vmem>>) attributes {dimension_semantics = [#tpu.dimension_semantics<parallel>, #tpu.dimension_semantics<arbitrary>], iteration_bounds = array<i64: 1, 1>, scalar_prefetch = 0 : i64, scratch_operands = 1 : i64, tpu.core_type = #tpu.core_type<tc>, window_params = [{transform_indices = @transform_0, window_bounds = array<i64: 8, 256>}, {transform_indices = @transform_1, window_bounds = array<i64: 8, 256>}, {transform_indices = @transform_2, window_bounds = array<i64: 1, 1, 8>}]} {
    %c0_i32 = arith.constant 0 : i32
    %0 = arith.cmpi eq, %arg1, %c0_i32 : i32
    %1 = arith.extui %0 : i1 to i32
    %c0_i32_0 = arith.constant 0 : i32
    %2 = arith.cmpi ne, %1, %c0_i32_0 : i32
    scf.if %2 {
      %cst_36 = arith.constant 0.000000e+00 : f32
      %51 = vector.broadcast %cst_36 : f32 to vector<5x8x1xf32>
      %c0_37 = arith.constant 0 : index
      %c0_38 = arith.constant 0 : index
      %c0_39 = arith.constant 0 : index
      %52 = vector.load %arg5[%c0_37, %c0_38, %c0_39] : memref<5x8x1xf32, #tpu.memory_space<vmem>>, vector<5x8x1xf32>
      tpu.vector_store %arg5[%c0_37, %c0_38, %c0_39], %51 {strides = array<i32>} : memref<5x8x1xf32, #tpu.memory_space<vmem>>, vector<5x8x1xf32>,
    } else {
    }
    %c0 = arith.constant 0 : index
    %c0_1 = arith.constant 0 : index
    %3 = vector.load %arg2[%c0, %c0_1] : memref<8x256xf32, #tpu.memory_space<vmem>>, vector<8x256xf32>
    %c0_2 = arith.constant 0 : index
    %c0_3 = arith.constant 0 : index
    %4 = vector.load %arg3[%c0_2, %c0_3] : memref<8x256xf32, #tpu.memory_space<vmem>>, vector<8x256xf32>
    %c0_4 = arith.constant 0 : index
    %c0_5 = arith.constant 0 : index
    %c0_6 = arith.constant 0 : index
    %5 = vector.load %arg5[%c0_4, %c0_5, %c0_6] : memref<5x8x1xf32, #tpu.memory_space<vmem>>, vector<1x8x1xf32>
    %6 = vector.shape_cast %5 : vector<1x8x1xf32> to vector<8x1xf32>
    %cst = arith.constant dense<0.000000e+00> : vector<8xf32>
    %7 = vector.multi_reduction <add>, %3, %cst [1] : vector<8x256xf32> to vector<8xf32>
    %8 = vector.shape_cast %7 : vector<8xf32> to vector<8x1xf32>
    %9 = arith.addf %6, %8 : vector<8x1xf32>
    %c0_7 = arith.constant 0 : index
    %c0_8 = arith.constant 0 : index
    %c0_9 = arith.constant 0 : index
    %10 = vector.load %arg5[%c0_7, %c0_8, %c0_9] : memref<5x8x1xf32, #tpu.memory_space<vmem>>, vector<1x8x1xf32>
    %11 = vector.shape_cast %10 : vector<1x8x1xf32> to vector<8x1xf32>
    %12 = vector.shape_cast %9 : vector<8x1xf32> to vector<1x8x1xf32>
    tpu.vector_store %arg5[%c0_7, %c0_8, %c0_9], %12 {strides = array<i32>} : memref<5x8x1xf32, #tpu.memory_space<vmem>>, vector<1x8x1xf32>,
    %c1 = arith.constant 1 : index
    %c0_10 = arith.constant 0 : index
    %c0_11 = arith.constant 0 : index
    %13 = vector.load %arg5[%c1, %c0_10, %c0_11] : memref<5x8x1xf32, #tpu.memory_space<vmem>>, vector<1x8x1xf32>
    %14 = vector.shape_cast %13 : vector<1x8x1xf32> to vector<8x1xf32>
    %cst_12 = arith.constant dense<0.000000e+00> : vector<8xf32>
    %15 = vector.multi_reduction <add>, %4, %cst_12 [1] : vector<8x256xf32> to vector<8xf32>
    %16 = vector.shape_cast %15 : vector<8xf32> to vector<8x1xf32>
    %17 = arith.addf %14, %16 : vector<8x1xf32>
    %c1_13 = arith.constant 1 : index
    %c0_14 = arith.constant 0 : index
    %c0_15 = arith.constant 0 : index
    %18 = vector.load %arg5[%c1_13, %c0_14, %c0_15] : memref<5x8x1xf32, #tpu.memory_space<vmem>>, vector<1x8x1xf32>
    %19 = vector.shape_cast %18 : vector<1x8x1xf32> to vector<8x1xf32>
    %20 = vector.shape_cast %17 : vector<8x1xf32> to vector<1x8x1xf32>
    tpu.vector_store %arg5[%c1_13, %c0_14, %c0_15], %20 {strides = array<i32>} : memref<5x8x1xf32, #tpu.memory_space<vmem>>, vector<1x8x1xf32>,
    %c2 = arith.constant 2 : index
    %c0_16 = arith.constant 0 : index
    %c0_17 = arith.constant 0 : index
    %21 = vector.load %arg5[%c2, %c0_16, %c0_17] : memref<5x8x1xf32, #tpu.memory_space<vmem>>, vector<1x8x1xf32>
    %22 = vector.shape_cast %21 : vector<1x8x1xf32> to vector<8x1xf32>
    %23 = arith.mulf %3, %4 : vector<8x256xf32>
    %cst_18 = arith.constant dense<0.000000e+00> : vector<8xf32>
    %24 = vector.multi_reduction <add>, %23, %cst_18 [1] : vector<8x256xf32> to vector<8xf32>
    %25 = vector.shape_cast %24 : vector<8xf32> to vector<8x1xf32>
    %26 = arith.addf %22, %25 : vector<8x1xf32>
    %c2_19 = arith.constant 2 : index
    %c0_20 = arith.constant 0 : index
    %c0_21 = arith.constant 0 : index
    %27 = vector.load %arg5[%c2_19, %c0_20, %c0_21] : memref<5x8x1xf32, #tpu.memory_space<vmem>>, vector<1x8x1xf32>
    %28 = vector.shape_cast %27 : vector<1x8x1xf32> to vector<8x1xf32>
    %29 = vector.shape_cast %26 : vector<8x1xf32> to vector<1x8x1xf32>
    tpu.vector_store %arg5[%c2_19, %c0_20, %c0_21], %29 {strides = array<i32>} : memref<5x8x1xf32, #tpu.memory_space<vmem>>, vector<1x8x1xf32>,
    %c3 = arith.constant 3 : index
    %c0_22 = arith.constant 0 : index
    %c0_23 = arith.constant 0 : index
    %30 = vector.load %arg5[%c3, %c0_22, %c0_23] : memref<5x8x1xf32, #tpu.memory_space<vmem>>, vector<1x8x1xf32>
    %31 = vector.shape_cast %30 : vector<1x8x1xf32> to vector<8x1xf32>
    %32 = arith.mulf %3, %3 : vector<8x256xf32>
    %cst_24 = arith.constant dense<0.000000e+00> : vector<8xf32>
    %33 = vector.multi_reduction <add>, %32, %cst_24 [1] : vector<8x256xf32> to vector<8xf32>
    %34 = vector.shape_cast %33 : vector<8xf32> to vector<8x1xf32>
    %35 = arith.addf %31, %34 : vector<8x1xf32>
    %c3_25 = arith.constant 3 : index
    %c0_26 = arith.constant 0 : index
    %c0_27 = arith.constant 0 : index
    %36 = vector.load %arg5[%c3_25, %c0_26, %c0_27] : memref<5x8x1xf32, #tpu.memory_space<vmem>>, vector<1x8x1xf32>
    %37 = vector.shape_cast %36 : vector<1x8x1xf32> to vector<8x1xf32>
    %38 = vector.shape_cast %35 : vector<8x1xf32> to vector<1x8x1xf32>
    tpu.vector_store %arg5[%c3_25, %c0_26, %c0_27], %38 {strides = array<i32>} : memref<5x8x1xf32, #tpu.memory_space<vmem>>, vector<1x8x1xf32>,
    %c4 = arith.constant 4 : index
    %c0_28 = arith.constant 0 : index
    %c0_29 = arith.constant 0 : index
    %39 = vector.load %arg5[%c4, %c0_28, %c0_29] : memref<5x8x1xf32, #tpu.memory_space<vmem>>, vector<1x8x1xf32>
    %40 = vector.shape_cast %39 : vector<1x8x1xf32> to vector<8x1xf32>
    %41 = arith.mulf %4, %4 : vector<8x256xf32>
    %cst_30 = arith.constant dense<0.000000e+00> : vector<8xf32>
    %42 = vector.multi_reduction <add>, %41, %cst_30 [1] : vector<8x256xf32> to vector<8xf32>
    %43 = vector.shape_cast %42 : vector<8xf32> to vector<8x1xf32>
    %44 = arith.addf %40, %43 : vector<8x1xf32>
    %c4_31 = arith.constant 4 : index
    %c0_32 = arith.constant 0 : index
    %c0_33 = arith.constant 0 : index
    %45 = vector.load %arg5[%c4_31, %c0_32, %c0_33] : memref<5x8x1xf32, #tpu.memory_space<vmem>>, vector<1x8x1xf32>
    %46 = vector.shape_cast %45 : vector<1x8x1xf32> to vector<8x1xf32>
    %47 = vector.shape_cast %44 : vector<8x1xf32> to vector<1x8x1xf32>
    tpu.vector_store %arg5[%c4_31, %c0_32, %c0_33], %47 {strides = array<i32>} : memref<5x8x1xf32, #tpu.memory_space<vmem>>, vector<1x8x1xf32>,
    %c0_i32_34 = arith.constant 0 : i32
    %48 = arith.cmpi eq, %arg1, %c0_i32_34 : i32
    %49 = arith.extui %48 : i1 to i32
    %c0_i32_35 = arith.constant 0 : i32
    %50 = arith.cmpi ne, %49, %c0_i32_35 : i32
    scf.if %50 {
      %c2_36 = arith.constant 2 : index
      %c0_37 = arith.constant 0 : index
      %c0_38 = arith.constant 0 : index
      %51 = vector.load %arg5[%c2_36, %c0_37, %c0_38] : memref<5x8x1xf32, #tpu.memory_space<vmem>>, vector<1x8x1xf32>
      %52 = vector.shape_cast %51 : vector<1x8x1xf32> to vector<8x1xf32>
      %c3_39 = arith.constant 3 : index
      %c0_40 = arith.constant 0 : index
      %c0_41 = arith.constant 0 : index
      %53 = vector.load %arg5[%c3_39, %c0_40, %c0_41] : memref<5x8x1xf32, #tpu.memory_space<vmem>>, vector<1x8x1xf32>
      %54 = vector.shape_cast %53 : vector<1x8x1xf32> to vector<8x1xf32>
      %c4_42 = arith.constant 4 : index
      %c0_43 = arith.constant 0 : index
      %c0_44 = arith.constant 0 : index
      %55 = vector.load %arg5[%c4_42, %c0_43, %c0_44] : memref<5x8x1xf32, #tpu.memory_space<vmem>>, vector<1x8x1xf32>
      %56 = vector.shape_cast %55 : vector<1x8x1xf32> to vector<8x1xf32>
      %c0_45 = arith.constant 0 : index
      %c0_46 = arith.constant 0 : index
      %c0_47 = arith.constant 0 : index
      %57 = vector.load %arg5[%c0_45, %c0_46, %c0_47] : memref<5x8x1xf32, #tpu.memory_space<vmem>>, vector<1x8x1xf32>
      %58 = vector.shape_cast %57 : vector<1x8x1xf32> to vector<8x1xf32>
      %c1_48 = arith.constant 1 : index
      %c0_49 = arith.constant 0 : index
      %c0_50 = arith.constant 0 : index
      %59 = vector.load %arg5[%c1_48, %c0_49, %c0_50] : memref<5x8x1xf32, #tpu.memory_space<vmem>>, vector<1x8x1xf32>
      %60 = vector.shape_cast %59 : vector<1x8x1xf32> to vector<8x1xf32>
      %61 = arith.mulf %58, %60 : vector<8x1xf32>
      %cst_51 = arith.constant 3.906250e-03 : f32
      %62 = vector.broadcast %cst_51 : f32 to vector<8x1xf32>
      %63 = arith.mulf %61, %62 : vector<8x1xf32>
      %64 = arith.subf %52, %63 : vector<8x1xf32>
      %65 = arith.mulf %58, %58 : vector<8x1xf32>
      %cst_52 = arith.constant 3.906250e-03 : f32
      %66 = vector.broadcast %cst_52 : f32 to vector<8x1xf32>
      %67 = arith.mulf %65, %66 : vector<8x1xf32>
      %68 = arith.subf %54, %67 : vector<8x1xf32>
      %69 = arith.mulf %60, %60 : vector<8x1xf32>
      %cst_53 = arith.constant 3.906250e-03 : f32
      %70 = vector.broadcast %cst_53 : f32 to vector<8x1xf32>
      %71 = arith.mulf %69, %70 : vector<8x1xf32>
      %72 = arith.subf %56, %71 : vector<8x1xf32>
      %73 = arith.mulf %64, %64 : vector<8x1xf32>
      %74 = arith.divf %73, %72 : vector<8x1xf32>
      %75 = arith.subf %68, %74 : vector<8x1xf32>
      %cst_54 = arith.constant 0.000000e+00 : f32
      %76 = vector.broadcast %cst_54 : f32 to vector<8x1xf32>
      %77 = arith.maximumf %75, %76 : vector<8x1xf32>
      %cst_55 = arith.constant 9.99999993E-9 : f32
      %78 = vector.broadcast %cst_55 : f32 to vector<8x1xf32>
      %79 = arith.addf %77, %78 : vector<8x1xf32>
      %80 = arith.divf %74, %79 : vector<8x1xf32>
      %cst_56 = arith.constant 9.99999993E-9 : f32
      %81 = vector.broadcast %cst_56 : f32 to vector<8x1xf32>
      %82 = arith.addf %80, %81 : vector<8x1xf32>
      %83 = math.log %82 : vector<8x1xf32>
      %cst_57 = arith.constant 4.34294462 : f32
      %84 = vector.broadcast %cst_57 : f32 to vector<8x1xf32>
      %85 = arith.mulf %84, %83 : vector<8x1xf32>
      %86 = vector.shape_cast %85 : vector<8x1xf32> to vector<1x1x8xf32>
      %c0_58 = arith.constant 0 : index
      %c0_59 = arith.constant 0 : index
      %c0_60 = arith.constant 0 : index
      %87 = vector.load %arg4[%c0_58, %c0_59, %c0_60] : memref<1x1x8xf32, #tpu.memory_space<vmem>>, vector<1x1x8xf32>
      tpu.vector_store %arg4[%c0_58, %c0_59, %c0_60], %86 {strides = array<i32>} : memref<1x1x8xf32, #tpu.memory_space<vmem>>, vector<1x1x8xf32>,
    } else {
    }
    return
  }
  func.func @transform_0(%arg0: i32, %arg1: i32) -> (i32, i32) {
    %c0_i32 = arith.constant 0 : i32
    return %arg0, %arg1 : i32, i32
  }
  func.func @transform_1(%arg0: i32, %arg1: i32) -> (i32, i32) {
    %c0_i32 = arith.constant 0 : i32
    return %arg0, %arg1 : i32, i32
  }
  func.func @transform_2(%arg0: i32, %arg1: i32) -> (i32, i32, i32) {
    %c0_i32 = arith.constant 0 : i32
    %c0_i32_0 = arith.constant 0 : i32
    %c0_i32_1 = arith.constant 0 : i32
    return %arg0, %c0_i32, %c0_i32_0 : i32, i32, i32
  }
}

</mosaic_0001>

<llo_original>
// kernel: tpu_custom_call.1
$region0: #{tpu_custom_call.1}
  #allocation0 [shape = 'u32[]', space=smem, size = 0x4, offset = 0x4, fixed_abs, tag = 'smem constant byte address 0x4 - core index']
  #allocation1 [shape = 'u32[144,128]{1,0:T(1,128)}', space=vmem, size = 0x12000, scoped, tag = 'internal scratch']
  #allocation2 [shape = 'f32[5,8,1]{2,1,0:T(8,128)}', space=vmem, size = 0x5000, scoped, tag = 'scratch operand']
  %s0 = inlined_call_operand.hbm [shape: f32[8,256], index: 0, kind: input, shape index: {}]
  %s1 = inlined_call_operand.hbm [shape: f32[8,256], index: 1, kind: input, shape index: {}]
  %s2 = inlined_call_operand.hbm [shape: f32[1,1,8], index: 2, kind: output, shape index: {}]
  %s3 = sld [smem:[#allocation0]]
  $region34: #{tpu_custom_call.1} parent=0
    _
  %s5 = ssub.s32 1, %s3
  %s6 = scalar_select 0, %s5, %s3
  $region1: #{tpu_custom_call.1} parent=0
    #allocation3 [shape = 'u8[8192]{0}', space=vmem, size = 0x2000, scoped, tag = 'input window, operand 0, single buffered']
    #allocation4 [shape = 's32[1]{0}', space=sflag, size = 0x4, scoped, tag = 'scoped memory for tpu_custom_call.1']
    #allocation5 [shape = 's32[1]{0}', space=sflag, size = 0x4, scoped, tag = 'scoped memory for tpu_custom_call.1']
    #allocation6 [shape = 'u8[8192]{0}', space=vmem, size = 0x2000, scoped, tag = 'input window, operand 1, single buffered']
    #allocation7 [shape = 's32[1]{0}', space=sflag, size = 0x4, scoped, tag = 'scoped memory for tpu_custom_call.1']
    #allocation8 [shape = 'u8[512]{0}', space=vmem, size = 0x400, scoped, tag = 'output window, operand 0, single buffered']
    %7 = vsyncpa [#allocation4], 0
    %8 = vsyncpa [#allocation7], 0
    %9 = vsyncpa [#allocation5], 0
    // Predicated region
    $region2: #{tpu_custom_call.1} parent=1 // pred_check
      _
    $region3: #{tpu_custom_call.1} parent=1 // pred_check_branch
      %11 = sbr.rel (0) target = $region5
    $region4: #{tpu_custom_call.1} parent=1 // pred_region
      %s13 = ssub.s32 256, 256
      %14 = vsyncadd [#allocation4], %s13
      %s16 = sshll.u32 [#allocation3], 4
      %s17 = int_to_ptr.vmem [resolvable:$true] %s16
      %19 = dma.hbm_to_vmem [thread:$0]  %s0, 256, %s17, [#allocation4]
    $region5: #{tpu_custom_call.1} parent=1 // pred_fallthru
      _
    // Predicated region
    $region6: #{tpu_custom_call.1} parent=1 // pred_check
      _
    $region7: #{tpu_custom_call.1} parent=1 // pred_check_branch
      %21 = sbr.rel (0) target = $region9
    $region8: #{tpu_custom_call.1} parent=1 // pred_region
      %s23 = ssub.s32 256, 256
      %24 = vsyncadd [#allocation7], %s23
      %s26 = sshll.u32 [#allocation6], 4
      %s27 = int_to_ptr.vmem [resolvable:$true] %s26
      %29 = dma.hbm_to_vmem [thread:$0]  %s1, 256, %s27, [#allocation7]
    $region9: #{tpu_custom_call.1} parent=1 // pred_fallthru
      _
    // Predicated region
    $region10: #{tpu_custom_call.1} parent=1 // pred_check
      _
    $region11: #{tpu_custom_call.1} parent=1 // pred_check_branch
      %31 = sbr.rel (0) target = $region13
    $region12: #{tpu_custom_call.1} parent=1 // pred_region
      %32 = dma.done [#allocation4], 256
    $region13: #{tpu_custom_call.1} parent=1 // pred_fallthru
      _
    // Predicated region
    $region14: #{tpu_custom_call.1} parent=1 // pred_check
      _
    $region15: #{tpu_custom_call.1} parent=1 // pred_check_branch
      %34 = sbr.rel (0) target = $region17
    $region16: #{tpu_custom_call.1} parent=1 // pred_region
      %35 = dma.done [#allocation7], 256
    $region17: #{tpu_custom_call.1} parent=1 // pred_fallthru
      _
    %p36 = scmp.eq.s32.totalorder 0, 0
    // Predicated region
    $region18: #{tpu_custom_call.1} parent=1 // pred_check
      %p37 = pneg %p36
    $region19: #{tpu_custom_call.1} parent=1 // pred_check_branch
      %39 = sbr.rel (%p37) target = $region21
    $region20: #{tpu_custom_call.1} parent=1 // pred_region
      %vm40 = vcmask 7168
      %41 = vst.msk [vmem:[#allocation2] sm:$0xff] %vm40, 0.0
      %42 = vst.msk [vmem:[#allocation2 + $0x8] sm:$0xff] %vm40, 0.0
      %43 = vst.msk [vmem:[#allocation2 + $0x10] sm:$0xff] %vm40, 0.0
      %44 = vst.msk [vmem:[#allocation2 + $0x18] sm:$0xff] %vm40, 0.0
      %45 = vst.msk [vmem:[#allocation2 + $0x20] sm:$0xff] %vm40, 0.0
    $region21: #{tpu_custom_call.1} parent=1 // pred_fallthru
      _
    %v46 = vld [vmem:[#allocation3] sm:$0xff]
    %v47 = vld [vmem:[#allocation3 + $0x8] sm:$0xff]
    %v48 = vld [vmem:[#allocation6] sm:$0xff]
    %v49 = vld [vmem:[#allocation6 + $0x8] sm:$0xff]
    %v50 = vld [vmem:[#allocation2] sm:$0xff]
    %v51 = vadd.f32 %v46, %v47
    %52 = vadd.xlane.f32.xlu0 %v51
    %v53 = vpop.xlane.xlu0 %52
    %v54 = vadd.f32 %v50, %v53
    %vm55 = vcmask 7168
    %56 = vst.msk [vmem:[#allocation2] sm:$0xff] %vm55, %v54
    %s57 = scalar_lea.vmem [#allocation2], 8
    %v58 = vld [vmem:[%s57] sm:$0xff]
    %v59 = vadd.f32 %v48, %v49
    %60 = vadd.xlane.f32.xlu0 %v59
    %v61 = vpop.xlane.xlu0 %60
    %v62 = vadd.f32 %v58, %v61
    %63 = vst.msk [vmem:[%s57] sm:$0xff] %vm55, %v62
    %s64 = scalar_lea.vmem [#allocation2], 16
    %v65 = vld [vmem:[%s64] sm:$0xff]
    %v66 = vmul.f32 %v46, %v48
    %v67 = vmul.f32 %v47, %v49
    %v68 = vadd.f32 %v66, %v67
    %69 = vadd.xlane.f32.xlu0 %v68
    %v70 = vpop.xlane.xlu0 %69
    %v71 = vadd.f32 %v65, %v70
    %72 = vst.msk [vmem:[%s64] sm:$0xff] %vm55, %v71
    %s73 = scalar_lea.vmem [#allocation2], 24
    %v74 = vld [vmem:[%s73] sm:$0xff]
    %v75 = vmul.f32 %v46, %v46
    %v76 = vmul.f32 %v47, %v47
    %v77 = vadd.f32 %v75, %v76
    %78 = vadd.xlane.f32.xlu0 %v77
    %v79 = vpop.xlane.xlu0 %78
    %v80 = vadd.f32 %v74, %v79
    %81 = vst.msk [vmem:[%s73] sm:$0xff] %vm55, %v80
    %s82 = scalar_lea.vmem [#allocation2], 32
    %v83 = vld [vmem:[%s82] sm:$0xff]
    %v84 = vmul.f32 %v48, %v48
    %v85 = vmul.f32 %v49, %v49
    %v86 = vadd.f32 %v84, %v85
    %87 = vadd.xlane.f32.xlu0 %v86
    %v88 = vpop.xlane.xlu0 %87
    %v89 = vadd.f32 %v83, %v88
    %90 = vst.msk [vmem:[%s82] sm:$0xff] %vm55, %v89
    // Predicated region
    $region22: #{tpu_custom_call.1} parent=1 // pred_check
      %p91 = pneg %p36
    $region23: #{tpu_custom_call.1} parent=1 // pred_check_branch
      %93 = sbr.rel (%p91) target = $region25
    $region24: #{tpu_custom_call.1} parent=1 // pred_region
      %v94 = vld [vmem:[%s64] sm:$0xff]
      %v95 = vld [vmem:[%s73] sm:$0xff]
      %v96 = vld [vmem:[%s82] sm:$0xff]
      %v97 = vld [vmem:[#allocation2] sm:$0xff]
      %v98 = vld [vmem:[%s57] sm:$0xff]
      %v99 = vmul.f32 %v97, %v98
      %v100 = vmul.f32 %v99, 0.00390625
      %v101 = vsub.f32 %v94, %v100
      %v102 = vmul.f32 %v97, %v97
      %v103 = vmul.f32 %v102, 0.00390625
      %v104 = vsub.f32 %v95, %v103
      %v105 = vmul.f32 %v98, %v98
      %v106 = vmul.f32 %v105, 0.00390625
      %v107 = vsub.f32 %v96, %v106
      %v108 = vmul.f32 %v101, %v101
      %v109 = vrcp.pop %v107
      %v110 = vmul.f32 %v108, %v109
      %v111 = vsub.f32 %v104, %v110
      %v112 = vmax.f32 %v111, 0.0
      %v113 = vadd.f32 %v112, 1e-08
      %v114 = vrcp.pop %v113
      %v115 = vmul.f32 %v110, %v114
      %v116 = vadd.f32 %v115, 1e-08
      %v117 = vlog2.pop %v116
      %v118 = vmul.f32 %v117, 0.6931472
      %v119 = vmul.f32 %v118, 4.3429446
      %121 = vset.pattern.permute.xlu0 0
      %122 = vperm.xlu0 %121, %v119
      %v123 = vpop.permute.xlu0 %122
      %v124 = vlaneseq
      %v125 = vand.u32 %v124, 127
      %v126 = vlaneseq
      %v127 = vshrl.u32 %v126, 7
      %v128 = vsub.s32 %v125, %v127
      %v129 = vrot.slane %v123, %v128
      %vm131 = vcmask 57344
      %132 = vst.msk [vmem:[#allocation8] sm:$0x1] %vm131, %v129
    $region25: #{tpu_custom_call.1} parent=1 // pred_fallthru
      _
    // Predicated region
    $region26: #{tpu_custom_call.1} parent=1 // pred_check
      _
    $region27: #{tpu_custom_call.1} parent=1 // pred_check_branch
      %134 = sbr.rel (0) target = $region29
    $region28: #{tpu_custom_call.1} parent=1 // pred_region
      %s136 = ssub.s32 16, 16
      %137 = vsyncadd [#allocation5], %s136
      %s139 = sshll.u32 [#allocation8], 4
      %s140 = int_to_ptr.vmem [resolvable:$true] %s139
      %142 = dma.vmem_to_hbm [thread:$0]  %s140, 16, %s2, [#allocation5]
    $region29: #{tpu_custom_call.1} parent=1 // pred_fallthru
      _
    // Predicated region
    $region30: #{tpu_custom_call.1} parent=1 // pred_check
      _
    $region31: #{tpu_custom_call.1} parent=1 // pred_check_branch
      %144 = sbr.rel (0) target = $region33
    $region32: #{tpu_custom_call.1} parent=1 // pred_region
      %145 = dma.done [#allocation5], 16
    $region33: #{tpu_custom_call.1} parent=1 // pred_fallthru
      _
    %146 = vsyncpa [#allocation4], 1
    %147 = vsyncpa [#allocation7], 1
    %148 = vsyncpa [#allocation5], 1

</llo_original>
